<compile_context>
chip_gen: v6e
topology: v6e:2x2x1
jax: 0.10.0
libtpu: 0.0.40
codegen_flags: <defaults>
</compile_context>

<pallas_src>
import jax
import jax.numpy as jnp
from jax.experimental import pallas as pl
from jax.experimental.pallas import tpu as pltpu


# ---------------------------------------------------------------------------
# Kernel
# ---------------------------------------------------------------------------
def _make_kernel(g_ch, l_ch, int_ch, use_mxu):
    """Build the kernel body for static channel sizes / contraction path."""

    def kernel(g_ref, x_ref, w_ref, bpsi_ref, o_ref):
        # Block shapes (spatial S on lanes):
        #   g_ref : (B_TILE, G_CH, S)     x_ref : (B_TILE, L_CH, S)
        #   o_ref : (B_TILE, L_CH, S)
        #   w_ref : (INT_CH, G_CH + L_CH + 2) packed [wg_t | wx_t | bg+bx | wpsi]
        #   bpsi_ref : (1,) scalar in SMEM
        w = w_ref[...]
        wg_t = w[:, :g_ch]                              # (INT_CH, G_CH)
        wx_t = w[:, g_ch:g_ch + l_ch]                   # (INT_CH, L_CH)
        bgx = w[:, g_ch + l_ch:g_ch + l_ch + 1]         # (INT_CH, 1)
        wpsi = w[:, g_ch + l_ch + 1:g_ch + l_ch + 2]    # (INT_CH, 1)
        bpsi = bpsi_ref[0]

        b_tile = g_ref.shape[0]
        s = g_ref.shape[2]

        for b in range(b_tile):                         # unrolled; b_tile small
            g = g_ref[b]                                # (G_CH, S)
            x = x_ref[b]                                # (L_CH, S)

            if use_mxu:
                # Realistic channel widths: keep the contraction on the MXU
                # (its slot is otherwise idle) and the result lane-dense on S.
                h = (jnp.dot(wg_t, g, preferred_element_type=jnp.float32)
                     + jnp.dot(wx_t, x, preferred_element_type=jnp.float32)
                     + bgx)
            else:
                # Tiny channel counts: unrolled VPU broadcast-FMAs; an MXU
                # matmul with K=4 / N=8 would just pay MXU latency for nothing.
                acc = jnp.broadcast_to(bgx, (int_ch, s))
                for c in range(g_ch):                   # unrolled at trace time
                    acc = acc + wg_t[:, c:c + 1] * g[c:c + 1, :]
                for c in range(l_ch):
                    acc = acc + wx_t[:, c:c + 1] * x[c:c + 1, :]
                h = acc

            h = jnp.maximum(h, 0.0)                                   # ReLU

            # psi projection (single output channel): VPU multiply + sublane
            # (XLU) reduction; an M=1 MXU matmul would waste the systolic array.
            logit = jnp.sum(wpsi * h, axis=0, keepdims=True) + bpsi   # (1, S)
            # sigmoid via a single EUP tanh (no reciprocal needed).
            psi = 0.5 * jnp.tanh(0.5 * logit) + 0.5

            o_ref[b] = (x * psi).astype(o_ref.dtype)                  # lane-dense

    return kernel


# ---------------------------------------------------------------------------
# Tiling heuristics
# ---------------------------------------------------------------------------
def _largest_divisor_le(n, cap):
    cap = max(1, min(n, cap))
    for d in range(cap, 0, -1):
        if n % d == 0:
            return d
    return 1


def _spatial_tile(s_total, cap):
    """Largest divisor of s_total that is <= cap and a multiple of 128, else
    the full extent (full-extent blocks are always legal)."""
    if s_total <= cap:
        return s_total
    t = (min(cap, s_total) // 128) * 128
    while t >= 128:
        if s_total % t == 0:
            return t
        t -= 128
    return s_total


def _round_up(x, m):
    return (x + m - 1) // m * m


# ---------------------------------------------------------------------------
# Wrapper
# ---------------------------------------------------------------------------
def attention_block_pallas(g, x, params, *, tile_s=None, b_tile=None,
                           use_mxu=None, vmem_budget_bytes=8 << 20):
    """g, x: NCHW float32.  Returns x * psi (NCHW)."""
    n, g_ch, hgt, wid = g.shape
    nx, l_ch, hx, wx_ = x.shape
    assert (n, hgt, wid) == (nx, hx, wx_)

    w_pack = params["w_pack"]
    bpsi = params["bpsi"]
    int_ch = w_pack.shape[0]
    assert w_pack.shape[1] == g_ch + l_ch + 2

    if use_mxu is None:
        # VPU broadcast-FMA path only for tiny channel counts; otherwise MXU.
        use_mxu = (max(g_ch, l_ch) >= 16) or (int_ch >= 32)

    s_total = hgt * wid
    dtype_bytes = jnp.dtype(x.dtype).itemsize

    # Live VMEM bytes per (batch element, spatial pixel) in one grid step:
    # double-buffered g/x/out blocks + f32 intermediates (h, psi, temps).
    act_px = (g_ch + 2 * l_ch) * dtype_bytes
    live_px = 2 * act_px + (int_ch + 4) * 4

    if tile_s is None:
        tile_s = _spatial_tile(s_total, max(128, vmem_budget_bytes // live_px))
    assert s_total % tile_s == 0
    assert tile_s == s_total or tile_s % 128 == 0

    if b_tile is None:
        b_tile = _largest_divisor_le(
            n, max(1, vmem_budget_bytes // (tile_s * live_px)))
    assert n % b_tile == 0

    # Guarantee >= 2 grid programs when the problem allows, so v7x's two
    # TensorCores both get work (no-op on single-core v5e/v6e).
    if (n // b_tile) * (s_total // tile_s) < 2:
        if b_tile > 1:
            b_tile = _largest_divisor_le(n, b_tile // 2)
        elif tile_s > 128 and tile_s % 256 == 0 and s_total % (tile_s // 2) == 0:
            tile_s //= 2

    # Explicit VMEM budget (double-buffered activations + padded weights +
    # f32 intermediates), with headroom; capped well under v7x's 64 MiB.
    act_block_bytes = b_tile * tile_s * act_px
    w_pad_bytes = _round_up(int_ch, 8) * _round_up(g_ch + l_ch + 2, 128) * 4
    inter_bytes = b_tile * tile_s * (int_ch + 4) * 4
    vmem_needed = 2 * act_block_bytes + 2 * w_pad_bytes + inter_bytes
    vmem_limit = int(min(max(2 * vmem_needed, 16 << 20), 48 << 20))

    # NCHW -> (N, C, H*W): pure reshape, no transpose, no extra HBM traffic.
    g_flat = g.reshape(n, g_ch, s_total)
    x_flat = x.reshape(n, l_ch, s_total)

    grid = (n // b_tile, s_total // tile_s)

    def act_spec(c):
        return pl.BlockSpec((b_tile, c, tile_s), lambda b, sidx: (b, 0, sidx))

    kernel = _make_kernel(g_ch, l_ch, int_ch, use_mxu)

    out_flat = pl.pallas_call(
        kernel,
        out_shape=jax.ShapeDtypeStruct((n, l_ch, s_total), x.dtype),
        grid_spec=pltpu.PrefetchScalarGridSpec(
            num_scalar_prefetch=0,
            grid=grid,
            in_specs=[
                act_spec(g_ch),                                       # g
                act_spec(l_ch),                                       # x
                pl.BlockSpec((int_ch, g_ch + l_ch + 2),
                             lambda b, sidx: (0, 0)),                 # packed W
                pl.BlockSpec(memory_space=pltpu.MemorySpace.SMEM),    # bpsi
            ],
            out_specs=act_spec(l_ch),
        ),
        compiler_params=pltpu.CompilerParams(
            dimension_semantics=("parallel", "parallel"),
            vmem_limit_bytes=vmem_limit),
    )(g_flat, x_flat, w_pack, bpsi)

    return out_flat.reshape(n, l_ch, hgt, wid)


# ---------------------------------------------------------------------------
# Parameters (synthetic conv + folded eval-mode BatchNorm)
# ---------------------------------------------------------------------------
def make_params(key, g_ch, l_ch, int_ch, eps=1e-5):
    """Deterministic synthetic conv + BN params, BN (eval mode) folded in, with
    the four small operands packed into one (int_ch, g_ch+l_ch+2) array."""
    ks = jax.random.split(key, 15)

    def bn(kg, kb, km, kv, c):
        gamma = jax.random.normal(kg, (c,), jnp.float32) * 0.1 + 1.0
        beta = jax.random.normal(kb, (c,), jnp.float32) * 0.1
        mean = jax.random.normal(km, (c,), jnp.float32) * 0.1
        var = jax.random.uniform(kv, (c,), jnp.float32, minval=0.5, maxval=1.5)
        scale = gamma / jnp.sqrt(var + eps)
        bias = beta - mean * scale
        return scale, bias

    # PyTorch Conv2d(kernel_size=1) weight is (out, in, 1, 1); stored (in, out).
    wg = jax.random.normal(ks[0], (g_ch, int_ch), jnp.float32) * 0.2
    wx = jax.random.normal(ks[1], (l_ch, int_ch), jnp.float32) * 0.2
    wpsi = jax.random.normal(ks[2], (int_ch, 1), jnp.float32) * 0.2

    sg, bg = bn(ks[3], ks[4], ks[5], ks[6], int_ch)
    sx, bx = bn(ks[7], ks[8], ks[9], ks[10], int_ch)
    sp, bp = bn(ks[11], ks[12], ks[13], ks[14], 1)

    wg_t = jnp.transpose(wg * sg[None, :])        # (int_ch, g_ch)
    wx_t = jnp.transpose(wx * sx[None, :])        # (int_ch, l_ch)
    wpsi_eff = wpsi * sp[None, :]                 # (int_ch, 1)
    bgx = (bg + bx)[:, None]                      # (int_ch, 1)

    w_pack = jnp.concatenate([wg_t, wx_t, bgx, wpsi_eff], axis=1)
    return {"w_pack": w_pack, "bpsi": bp}


# ---------------------------------------------------------------------------
# Pure-JAX reference (same folded-BN formulation, NCHW layout)
# ---------------------------------------------------------------------------
def reference(g, x, p):
    n, g_ch, hgt, wid = g.shape
    l_ch = x.shape[1]
    w = p["w_pack"]
    wg_t = w[:, :g_ch]
    wx_t = w[:, g_ch:g_ch + l_ch]
    bgx = w[:, g_ch + l_ch]
    wpsi = w[:, g_ch + l_ch + 1]
    s = hgt * wid
    gf = g.reshape(n, g_ch, s)
    xf = x.reshape(n, l_ch, s)
    hp = jax.lax.Precision.HIGHEST
    g1 = jnp.einsum("jc,ncs->njs", wg_t, gf, precision=hp)
    x1 = jnp.einsum("jc,ncs->njs", wx_t, xf, precision=hp)
    hdn = jnp.maximum(g1 + x1 + bgx[None, :, None], 0.0)
    logit = jnp.einsum("j,njs->ns", wpsi, hdn, precision=hp)[:, None, :] + p["bpsi"][0]
    psi = jax.nn.sigmoid(logit)                   # (n, 1, s)
    return (xf * psi).reshape(n, l_ch, hgt, wid)


# ---------------------------------------------------------------------------
# Test
# ---------------------------------------------------------------------------
if __name__ == "__main__":
    key = jax.random.PRNGKey(0)

    # (N, G_CH, L_CH, INT_CH, H, W, tol)
    # Config 0 exercises the tiny-channel VPU path at a tight tolerance;
    # config 1 exercises the MXU dot path (looser tolerance: MXU f32 matmul
    # precision may differ from the HIGHEST-precision XLA reference).
    configs = [
        (2, 4, 4, 8, 16, 16, 1e-4),
        (2, 32, 32, 64, 16, 16, 2e-2),
    ]

    for i, (N, G_CH, L_CH, INT_CH, H, W, tol) in enumerate(configs):
        k_g, k_x, k_p = jax.random.split(jax.random.fold_in(key, i), 3)
        g = jax.random.normal(k_g, (N, G_CH, H, W), jnp.float32)
        x = jax.random.normal(k_x, (N, L_CH, H, W), jnp.float32)
        params = make_params(k_p, G_CH, L_CH, INT_CH)

        out = jax.block_until_ready(attention_block_pallas(g, x, params))
        ref = reference(g, x, params)

        assert out.shape == (N, L_CH, H, W)
        err = float(jnp.max(jnp.abs(out - ref)))
        assert err < tol, (i, err)

    print("KERNEL_OK")
</pallas_src>

<mosaic_0001>
module attributes {stable_mosaic.version = 11 : i64} {
  func.func @kernel(%arg0: i32, %arg1: i32, %arg2: memref<1x4x256xf32, #tpu.memory_space<vmem>>, %arg3: memref<1x4x256xf32, #tpu.memory_space<vmem>>, %arg4: memref<8x10xf32, #tpu.memory_space<vmem>>, %arg5: memref<1xf32, #tpu.memory_space<smem>>, %arg6: memref<1x4x256xf32, #tpu.memory_space<vmem>>) attributes {dimension_semantics = [#tpu.dimension_semantics<parallel>, #tpu.dimension_semantics<parallel>], iteration_bounds = array<i64: 2, 1>, scalar_prefetch = 0 : i64, scratch_operands = 0 : i64, tpu.core_type = #tpu.core_type<tc>, window_params = [{transform_indices = @transform_0, window_bounds = array<i64: 1, 4, 256>}, {transform_indices = @transform_1, window_bounds = array<i64: 1, 4, 256>}, {pipeline_mode = #tpu.pipeline_mode<synchronous>, transform_indices = @transform_2, window_bounds = array<i64: 8, 10>}, {transform_indices = @transform_3, window_bounds = array<i64: 1>}, {transform_indices = @transform_4, window_bounds = array<i64: 1, 4, 256>}]} {
    %c0 = arith.constant 0 : index
    %c0_0 = arith.constant 0 : index
    %0 = vector.load %arg4[%c0, %c0_0] : memref<8x10xf32, #tpu.memory_space<vmem>>, vector<8x10xf32>
    %1 = vector.extract_strided_slice %0 {offsets = [0, 0], sizes = [8, 4], strides = [1, 1]} : vector<8x10xf32> to vector<8x4xf32>
    %2 = vector.extract_strided_slice %0 {offsets = [0, 4], sizes = [8, 4], strides = [1, 1]} : vector<8x10xf32> to vector<8x4xf32>
    %3 = vector.extract_strided_slice %0 {offsets = [0, 8], sizes = [8, 1], strides = [1, 1]} : vector<8x10xf32> to vector<8x1xf32>
    %4 = vector.extract_strided_slice %0 {offsets = [0, 9], sizes = [8, 1], strides = [1, 1]} : vector<8x10xf32> to vector<8x1xf32>
    %c0_1 = arith.constant 0 : index
    %5 = memref.load %arg5[%c0_1] : memref<1xf32, #tpu.memory_space<smem>>
    %c0_2 = arith.constant 0 : index
    %c0_3 = arith.constant 0 : index
    %c0_4 = arith.constant 0 : index
    %6 = vector.load %arg2[%c0_2, %c0_3, %c0_4] : memref<1x4x256xf32, #tpu.memory_space<vmem>>, vector<1x4x256xf32>
    %7 = vector.shape_cast %6 : vector<1x4x256xf32> to vector<4x256xf32>
    %c0_5 = arith.constant 0 : index
    %c0_6 = arith.constant 0 : index
    %c0_7 = arith.constant 0 : index
    %8 = vector.load %arg3[%c0_5, %c0_6, %c0_7] : memref<1x4x256xf32, #tpu.memory_space<vmem>>, vector<1x4x256xf32>
    %9 = vector.shape_cast %8 : vector<1x4x256xf32> to vector<4x256xf32>
    %10 = vector.shape_cast %3 : vector<8x1xf32> to vector<8x1xf32>
    %11 = vector.broadcast %10 : vector<8x1xf32> to vector<8x256xf32>
    %12 = vector.extract_strided_slice %1 {offsets = [0, 0], sizes = [8, 1], strides = [1, 1]} : vector<8x4xf32> to vector<8x1xf32>
    %13 = vector.extract_strided_slice %7 {offsets = [0, 0], sizes = [1, 256], strides = [1, 1]} : vector<4x256xf32> to vector<1x256xf32>
    %14 = vector.broadcast %12 : vector<8x1xf32> to vector<8x256xf32>
    %15 = vector.broadcast %13 : vector<1x256xf32> to vector<8x256xf32>
    %16 = arith.mulf %14, %15 : vector<8x256xf32>
    %17 = arith.addf %11, %16 : vector<8x256xf32>
    %18 = vector.extract_strided_slice %1 {offsets = [0, 1], sizes = [8, 1], strides = [1, 1]} : vector<8x4xf32> to vector<8x1xf32>
    %19 = vector.extract_strided_slice %7 {offsets = [1, 0], sizes = [1, 256], strides = [1, 1]} : vector<4x256xf32> to vector<1x256xf32>
    %20 = vector.broadcast %18 : vector<8x1xf32> to vector<8x256xf32>
    %21 = vector.broadcast %19 : vector<1x256xf32> to vector<8x256xf32>
    %22 = arith.mulf %20, %21 : vector<8x256xf32>
    %23 = arith.addf %17, %22 : vector<8x256xf32>
    %24 = vector.extract_strided_slice %1 {offsets = [0, 2], sizes = [8, 1], strides = [1, 1]} : vector<8x4xf32> to vector<8x1xf32>
    %25 = vector.extract_strided_slice %7 {offsets = [2, 0], sizes = [1, 256], strides = [1, 1]} : vector<4x256xf32> to vector<1x256xf32>
    %26 = vector.broadcast %24 : vector<8x1xf32> to vector<8x256xf32>
    %27 = vector.broadcast %25 : vector<1x256xf32> to vector<8x256xf32>
    %28 = arith.mulf %26, %27 : vector<8x256xf32>
    %29 = arith.addf %23, %28 : vector<8x256xf32>
    %30 = vector.extract_strided_slice %1 {offsets = [0, 3], sizes = [8, 1], strides = [1, 1]} : vector<8x4xf32> to vector<8x1xf32>
    %31 = vector.extract_strided_slice %7 {offsets = [3, 0], sizes = [1, 256], strides = [1, 1]} : vector<4x256xf32> to vector<1x256xf32>
    %32 = vector.broadcast %30 : vector<8x1xf32> to vector<8x256xf32>
    %33 = vector.broadcast %31 : vector<1x256xf32> to vector<8x256xf32>
    %34 = arith.mulf %32, %33 : vector<8x256xf32>
    %35 = arith.addf %29, %34 : vector<8x256xf32>
    %36 = vector.extract_strided_slice %2 {offsets = [0, 0], sizes = [8, 1], strides = [1, 1]} : vector<8x4xf32> to vector<8x1xf32>
    %37 = vector.extract_strided_slice %9 {offsets = [0, 0], sizes = [1, 256], strides = [1, 1]} : vector<4x256xf32> to vector<1x256xf32>
    %38 = vector.broadcast %36 : vector<8x1xf32> to vector<8x256xf32>
    %39 = vector.broadcast %37 : vector<1x256xf32> to vector<8x256xf32>
    %40 = arith.mulf %38, %39 : vector<8x256xf32>
    %41 = arith.addf %35, %40 : vector<8x256xf32>
    %42 = vector.extract_strided_slice %2 {offsets = [0, 1], sizes = [8, 1], strides = [1, 1]} : vector<8x4xf32> to vector<8x1xf32>
    %43 = vector.extract_strided_slice %9 {offsets = [1, 0], sizes = [1, 256], strides = [1, 1]} : vector<4x256xf32> to vector<1x256xf32>
    %44 = vector.broadcast %42 : vector<8x1xf32> to vector<8x256xf32>
    %45 = vector.broadcast %43 : vector<1x256xf32> to vector<8x256xf32>
    %46 = arith.mulf %44, %45 : vector<8x256xf32>
    %47 = arith.addf %41, %46 : vector<8x256xf32>
    %48 = vector.extract_strided_slice %2 {offsets = [0, 2], sizes = [8, 1], strides = [1, 1]} : vector<8x4xf32> to vector<8x1xf32>
    %49 = vector.extract_strided_slice %9 {offsets = [2, 0], sizes = [1, 256], strides = [1, 1]} : vector<4x256xf32> to vector<1x256xf32>
    %50 = vector.broadcast %48 : vector<8x1xf32> to vector<8x256xf32>
    %51 = vector.broadcast %49 : vector<1x256xf32> to vector<8x256xf32>
    %52 = arith.mulf %50, %51 : vector<8x256xf32>
    %53 = arith.addf %47, %52 : vector<8x256xf32>
    %54 = vector.extract_strided_slice %2 {offsets = [0, 3], sizes = [8, 1], strides = [1, 1]} : vector<8x4xf32> to vector<8x1xf32>
    %55 = vector.extract_strided_slice %9 {offsets = [3, 0], sizes = [1, 256], strides = [1, 1]} : vector<4x256xf32> to vector<1x256xf32>
    %56 = vector.broadcast %54 : vector<8x1xf32> to vector<8x256xf32>
    %57 = vector.broadcast %55 : vector<1x256xf32> to vector<8x256xf32>
    %58 = arith.mulf %56, %57 : vector<8x256xf32>
    %59 = arith.addf %53, %58 : vector<8x256xf32>
    %cst = arith.constant 0.000000e+00 : f32
    %60 = vector.broadcast %cst : f32 to vector<8x256xf32>
    %61 = arith.maximumf %59, %60 : vector<8x256xf32>
    %62 = vector.broadcast %4 : vector<8x1xf32> to vector<8x256xf32>
    %63 = arith.mulf %62, %61 : vector<8x256xf32>
    %cst_8 = arith.constant dense<0.000000e+00> : vector<256xf32>
    %64 = vector.multi_reduction <add>, %63, %cst_8 [0] : vector<8x256xf32> to vector<256xf32>
    %65 = vector.shape_cast %64 : vector<256xf32> to vector<1x256xf32>
    %66 = vector.broadcast %5 : f32 to vector<1x256xf32>
    %67 = arith.addf %65, %66 : vector<1x256xf32>
    %cst_9 = arith.constant 5.000000e-01 : f32
    %68 = vector.broadcast %cst_9 : f32 to vector<1x256xf32>
    %69 = arith.mulf %68, %67 : vector<1x256xf32>
    %70 = math.tanh %69 : vector<1x256xf32>
    %cst_10 = arith.constant 5.000000e-01 : f32
    %71 = vector.broadcast %cst_10 : f32 to vector<1x256xf32>
    %72 = arith.mulf %71, %70 : vector<1x256xf32>
    %cst_11 = arith.constant 5.000000e-01 : f32
    %73 = vector.broadcast %cst_11 : f32 to vector<1x256xf32>
    %74 = arith.addf %72, %73 : vector<1x256xf32>
    %75 = vector.broadcast %74 : vector<1x256xf32> to vector<4x256xf32>
    %76 = arith.mulf %9, %75 : vector<4x256xf32>
    %c0_12 = arith.constant 0 : index
    %c0_13 = arith.constant 0 : index
    %c0_14 = arith.constant 0 : index
    %77 = vector.load %arg6[%c0_12, %c0_13, %c0_14] : memref<1x4x256xf32, #tpu.memory_space<vmem>>, vector<1x4x256xf32>
    %78 = vector.shape_cast %77 : vector<1x4x256xf32> to vector<4x256xf32>
    %79 = vector.shape_cast %76 : vector<4x256xf32> to vector<1x4x256xf32>
    tpu.vector_store %arg6[%c0_12, %c0_13, %c0_14], %79 {strides = array<i32>} : memref<1x4x256xf32, #tpu.memory_space<vmem>>, vector<1x4x256xf32>,
    return
  }
  func.func @transform_0(%arg0: i32, %arg1: i32) -> (i32, i32, i32) {
    %c0_i32 = arith.constant 0 : i32
    %c0_i32_0 = arith.constant 0 : i32
    return %arg0, %c0_i32, %arg1 : i32, i32, i32
  }
  func.func @transform_1(%arg0: i32, %arg1: i32) -> (i32, i32, i32) {
    %c0_i32 = arith.constant 0 : i32
    %c0_i32_0 = arith.constant 0 : i32
    return %arg0, %c0_i32, %arg1 : i32, i32, i32
  }
  func.func @transform_2(%arg0: i32, %arg1: i32) -> (i32, i32) {
    %c0_i32 = arith.constant 0 : i32
    %c0_i32_0 = arith.constant 0 : i32
    %c0_i32_1 = arith.constant 0 : i32
    return %c0_i32, %c0_i32_0 : i32, i32
  }
  func.func @transform_3(%arg0: i32, %arg1: i32) -> i32 {
    %c0_i32 = arith.constant 0 : i32
    %c0_i32_0 = arith.constant 0 : i32
    return %c0_i32 : i32
  }
  func.func @transform_4(%arg0: i32, %arg1: i32) -> (i32, i32, i32) {
    %c0_i32 = arith.constant 0 : i32
    %c0_i32_0 = arith.constant 0 : i32
    return %arg0, %c0_i32, %arg1 : i32, i32, i32
  }
}

</mosaic_0001>

<llo_original>
// kernel: tpu_custom_call.1
$region0: #{tpu_custom_call.1}
  #allocation0 [shape = 'u32[]', space=smem, size = 0x4, offset = 0x4, fixed_abs, tag = 'smem constant byte address 0x4 - core index']
  #allocation1 [shape = 'u32[144,128]{1,0:T(1,128)}', space=vmem, size = 0x12000, scoped, tag = 'internal scratch']
  #allocation2 [shape = 'f32[1]{0:T(128)S(6)}', space=smem, size = 0x200, scoped, tag = 'scoped memory for tpu_custom_call.1']
  %s0 = inlined_call_operand.hbm [shape: f32[2,4,256], index: 0, kind: input, shape index: {}]
  %s1 = inlined_call_operand.hbm [shape: f32[2,4,256], index: 1, kind: input, shape index: {}]
  %s2 = inlined_call_operand.hbm [shape: f32[8,10], index: 2, kind: input, shape index: {}]
  %s3 = inlined_call_operand.<no memory space> [shape: f32[1], index: 3, kind: input, shape index: {}]
  %s4 = inlined_call_operand.hbm [shape: f32[2,4,256], index: 4, kind: output, shape index: {}]
  %s5 = sld [smem:[#allocation0]]
  $region61: #{tpu_custom_call.1} parent=0
    _
  %s7 = ssub.s32 1, %s5
  %s8 = scalar_select 0, %s7, %s5
  %9 = sst [smem:[#allocation2]] %s3
  $region1: #{tpu_custom_call.1} parent=0
    #allocation3 [shape = 'u8[8192]{0}', space=vmem, size = 0x2000, scoped, tag = 'input window, operand 0']
    #allocation4 [shape = 's32[2]{0}', space=sflag, size = 0x8, scoped, tag = 'scoped memory for tpu_custom_call.1']
    #allocation5 [shape = 's32[2]{0}', space=sflag, size = 0x8, scoped, tag = 'scoped memory for tpu_custom_call.1']
    #allocation6 [shape = 'u8[8192]{0}', space=vmem, size = 0x2000, scoped, tag = 'input window, operand 1']
    #allocation7 [shape = 's32[2]{0}', space=sflag, size = 0x8, scoped, tag = 'scoped memory for tpu_custom_call.1']
    #allocation8 [shape = 'u8[4096]{0}', space=vmem, size = 0x1000, scoped, tag = 'input window, operand 2, single buffered']
    #allocation9 [shape = 'u8[8192]{0}', space=vmem, size = 0x2000, scoped, tag = 'output window, operand 0']
    %10 = vsyncpa [#allocation4], 0
    %s11 = scalar_lea.sflag [#allocation4], 1
    %12 = vsyncpa %s11, 0
    %13 = vsyncpa [#allocation7], 0
    %s14 = scalar_lea.sflag [#allocation7], 1
    %15 = vsyncpa %s14, 0
    %16 = vsyncpa [#allocation5], 0
    %s17 = scalar_lea.sflag [#allocation5], 1
    %18 = vsyncpa %s17, 0
    loop: start=0, step=1, limit=4
    $region2: #{tpu_custom_call.1} parent=1 // loop_pre_header
      _
    $region3: #{tpu_custom_call.1} parent=1 // loop_header
      %s20 = sphi 0, %s24
      %p21 = scmp.ge.s32.totalorder %s20, 4
      %s27 = sphi 0, %s39
      %s28 = sphi 0, %s35
      %s29 = sphi 0, %s27
      %s30 = sphi 0, %s28
      %s31 = sphi 0, %s29
      %s32 = sphi 0, %s30
      %s44 = sphi 0, %s46
      %s47 = sphi 0, %s44
      %s48 = sphi 0, %s47
      %s64 = sphi 0, %s48
      %s72 = sphi 0, %s74
      %s75 = sphi 0, %s72
      %s76 = sphi 0, %s75
      %s92 = sphi 0, %s76
      %s96 = sphi 0, %s96
      %s98 = sphi 0, %s96
      %s99 = sphi 0, %s98
      %s113 = sphi 0, %s99
      %s117 = sphi 0, %s117
      %s119 = sphi 0, %s117
      %s120 = sphi 0, %s119
      %s134 = sphi 0, %s120
      %s142 = sphi 0, %s144
      %s145 = sphi 0, %s142
      %s146 = sphi 0, %s145
      %s162 = sphi 0, %s146
    $region4: #{tpu_custom_call.1} parent=1 // loop_header_branch
      %23 = sbr.rel (%p21) target = $region8
    $region5: #{tpu_custom_call.1} parent=1 // loop_body
      %s25 = ssub.s32 %s20, 1
      %s26 = ssub.s32 %s20, 2
      %s33 = sadd.s32 1, %s28
      %p34 = scmp.ge.s32.totalorder %s33, 1
      %s35 = scalar_select %p34, 0, %s33
      %s36 = sadd.s32 1, %s27
      %s37 = scalar_select %p34, %s36, %s27
      %p38 = scmp.ge.s32.totalorder %s37, 2
      %s39 = scalar_select %p38, 0, %s37
      %s40 = ssub.s32 %s27, %s39
      %s41 = ssub.s32 %s28, %s35
      %s42 = sor.u32 %s40, %s41
      %p43 = scmp.eq.s32.totalorder %s42, 0
      %s45 = sadd.s32 %s44, 1
      %s46 = scalar_select %p43, %s44, %s45
      %p49 = pneg %p43
      %p50 = scmp.eq.s32.totalorder %s20, 1
      %p51 = por %p49, %p50
      %p52 = scmp.ne.s32.totalorder %s44, %s47
      %p53 = scmp.eq.s32.totalorder %s20, 0
      %p54 = por %p52, %p53
      %p55 = scmp.ne.s32.totalorder %s44, %s47
      %p56 = scmp.eq.s32.totalorder %s25, 1
      %p57 = por %p55, %p56
      %p58 = scmp.ne.s32.totalorder %s47, %s48
      %p59 = scmp.eq.s32.totalorder %s25, 0
      %p60 = por %p58, %p59
      %p61 = scmp.ne.s32.totalorder %s47, %s48
      %p62 = scmp.eq.s32.totalorder %s26, 1
      %p63 = por %p61, %p62
      %p65 = scmp.ne.s32.totalorder %s48, %s64
      %p66 = scmp.eq.s32.totalorder %s26, 0
      %p67 = por %p65, %p66
      %s68 = ssub.s32 %s27, %s39
      %s69 = ssub.s32 %s28, %s35
      %s70 = sor.u32 %s68, %s69
      %p71 = scmp.eq.s32.totalorder %s70, 0
      %s73 = sadd.s32 %s72, 1
      %s74 = scalar_select %p71, %s72, %s73
      %p77 = pneg %p71
      %p78 = scmp.eq.s32.totalorder %s20, 1
      %p79 = por %p77, %p78
      %p80 = scmp.ne.s32.totalorder %s72, %s75
      %p81 = scmp.eq.s32.totalorder %s20, 0
      %p82 = por %p80, %p81
      %p83 = scmp.ne.s32.totalorder %s72, %s75
      %p84 = scmp.eq.s32.totalorder %s25, 1
      %p85 = por %p83, %p84
      %p86 = scmp.ne.s32.totalorder %s75, %s76
      %p87 = scmp.eq.s32.totalorder %s25, 0
      %p88 = por %p86, %p87
      %p89 = scmp.ne.s32.totalorder %s75, %s76
      %p90 = scmp.eq.s32.totalorder %s26, 1
      %p91 = por %p89, %p90
      %p93 = scmp.ne.s32.totalorder %s76, %s92
      %p94 = scmp.eq.s32.totalorder %s26, 0
      %p95 = por %p93, %p94
      %s97 = sadd.s32 %s96, 1
      %p100 = scmp.eq.s32.totalorder %s20, 1
      %p101 = scmp.ne.s32.totalorder %s96, %s98
      %p102 = scmp.eq.s32.totalorder %s20, 0
      %p103 = por %p101, %p102
      %p104 = scmp.ne.s32.totalorder %s96, %s98
      %p105 = scmp.eq.s32.totalorder %s25, 1
      %p106 = por %p104, %p105
      %p107 = scmp.ne.s32.totalorder %s98, %s99
      %p108 = scmp.eq.s32.totalorder %s25, 0
      %p109 = por %p107, %p108
      %p110 = scmp.ne.s32.totalorder %s98, %s99
      %p111 = scmp.eq.s32.totalorder %s26, 1
      %p112 = por %p110, %p111
      %p114 = scmp.ne.s32.totalorder %s99, %s113
      %p115 = scmp.eq.s32.totalorder %s26, 0
      %p116 = por %p114, %p115
      %s118 = sadd.s32 %s117, 1
      %p121 = scmp.eq.s32.totalorder %s20, 1
      %p122 = scmp.ne.s32.totalorder %s117, %s119
      %p123 = scmp.eq.s32.totalorder %s20, 0
      %p124 = por %p122, %p123
      %p125 = scmp.ne.s32.totalorder %s117, %s119
      %p126 = scmp.eq.s32.totalorder %s25, 1
      %p127 = por %p125, %p126
      %p128 = scmp.ne.s32.totalorder %s119, %s120
      %p129 = scmp.eq.s32.totalorder %s25, 0
      %p130 = por %p128, %p129
      %p131 = scmp.ne.s32.totalorder %s119, %s120
      %p132 = scmp.eq.s32.totalorder %s26, 1
      %p133 = por %p131, %p132
      %p135 = scmp.ne.s32.totalorder %s120, %s134
      %p136 = scmp.eq.s32.totalorder %s26, 0
      %p137 = por %p135, %p136
      %s138 = ssub.s32 %s27, %s39
      %s139 = ssub.s32 %s28, %s35
      %s140 = sor.u32 %s138, %s139
      %p141 = scmp.eq.s32.totalorder %s140, 0
      %s143 = sadd.s32 %s142, 1
      %s144 = scalar_select %p141, %s142, %s143
      %p147 = pneg %p141
      %p148 = scmp.eq.s32.totalorder %s20, 1
      %p149 = por %p147, %p148
      %p150 = scmp.ne.s32.totalorder %s142, %s145
      %p151 = scmp.eq.s32.totalorder %s20, 0
      %p152 = por %p150, %p151
      %p153 = scmp.ne.s32.totalorder %s142, %s145
      %p154 = scmp.eq.s32.totalorder %s25, 1
      %p155 = por %p153, %p154
      %p156 = scmp.ne.s32.totalorder %s145, %s146
      %p157 = scmp.eq.s32.totalorder %s25, 0
      %p158 = por %p156, %p157
      %p159 = scmp.ne.s32.totalorder %s145, %s146
      %p160 = scmp.eq.s32.totalorder %s26, 1
      %p161 = por %p159, %p160
      %p163 = scmp.ne.s32.totalorder %s146, %s162
      %p164 = scmp.eq.s32.totalorder %s26, 0
      %p165 = por %p163, %p164
      %p166 = scmp.le.s32.totalorder 1, %s20
      %p167 = scmp.lt.s32.totalorder %s20, 3
      %p168 = pnand %p166, %p167
      %p169 = pneg %p168
      // Predicated region
      $region9: #{tpu_custom_call.1} parent=5 // pred_check
        _
      $region10: #{tpu_custom_call.1} parent=5 // pred_check_branch
        %171 = sbr.rel (%p168) target = $region12
      $region11: #{tpu_custom_call.1} parent=5 // pred_region
        %s172 = ssub.s32 %s20, 1
        // Predicated region
        $region13: #{tpu_custom_call.1} parent=11 // pred_check
          %p173 = pneg %p109
        $region14: #{tpu_custom_call.1} parent=11 // pred_check_branch
          %175 = sbr.rel (%p173) target = $region16
        $region15: #{tpu_custom_call.1} parent=11 // pred_region
          %s177 = ssub.s32 128, 128
          %178 = vsyncadd [#allocation7], %s177
          %s180 = sshll.u32 [#allocation8], 4
          %s181 = int_to_ptr.vmem [resolvable:$true] %s180
          %183 = dma.hbm_to_vmem [thread:$0]  %s2, 128, %s181, [#allocation7]
        $region16: #{tpu_custom_call.1} parent=11 // pred_fallthru
          _
        // Predicated region
        $region17: #{tpu_custom_call.1} parent=11 // pred_check
          %p184 = pneg %p130
        $region18: #{tpu_custom_call.1} parent=11 // pred_check_branch
          %186 = sbr.rel (%p184) target = $region20
        $region19: #{tpu_custom_call.1} parent=11 // pred_region
          _
        $region20: #{tpu_custom_call.1} parent=11 // pred_fallthru
          _
      $region12: #{tpu_custom_call.1} parent=5 // pred_fallthru
        _
      %p187 = scmp.lt.s32.totalorder %s20, 2
      // Predicated region
      $region21: #{tpu_custom_call.1} parent=5 // pred_check
        %p188 = pneg %p187
      $region22: #{tpu_custom_call.1} parent=5 // pred_check_branch
        %190 = sbr.rel (%p188) target = $region24
      $region23: #{tpu_custom_call.1} parent=5 // pred_region
        // Predicated region
        $region25: #{tpu_custom_call.1} parent=23 // pred_check
          %p191 = pneg %p54
        $region26: #{tpu_custom_call.1} parent=23 // pred_check_branch
          %193 = sbr.rel (%p191) target = $region28
        $region27: #{tpu_custom_call.1} parent=23 // pred_region
          %s194 = sand.u32 %s44, 1
          %s195 = scalar_lea.sflag [#allocation4], %s194
          %s196 = sand.u32 %s44, 1
          %s197 = smul.addr %s196, 8
          %s198 = scalar_lea.vmem [#allocation3], %s197
          %s199 = smul.u32 2, %s28
          %s201 = ssub.s32 128, 128
          %202 = vsyncadd %s195, %s201
          %s203 = smul.addr %s27, 2
          %s204 = sadd.s32 %s199, %s203
          %s205 = smul.addr %s204, 64
          %s206 = scalar_lea.hbm %s0, %s205
          %s208 = sshll.u32 %s198, 4
          %s209 = int_to_ptr.vmem [resolvable:$true] %s208
          %211 = dma.hbm_to_vmem [thread:$0]  %s206, 128, %s209, %s195
        $region28: #{tpu_custom_call.1} parent=23 // pred_fallthru
          _
        // Predicated region
        $region29: #{tpu_custom_call.1} parent=23 // pred_check
          %p212 = pneg %p82
        $region30: #{tpu_custom_call.1} parent=23 // pred_check_branch
          %214 = sbr.rel (%p212) target = $region32
        $region31: #{tpu_custom_call.1} parent=23 // pred_region
          %s215 = sand.u32 %s20, 1
          %s216 = scalar_lea.sflag [#allocation7], %s215
          %s217 = sand.u32 %s72, 1
          %s218 = smul.addr %s217, 8
          %s219 = scalar_lea.vmem [#allocation6], %s218
          %s220 = smul.u32 2, %s28
          %s222 = ssub.s32 128, 128
          %223 = vsyncadd %s216, %s222
          %s224 = smul.addr %s27, 2
          %s225 = sadd.s32 %s220, %s224
          %s226 = smul.addr %s225, 64
          %s227 = scalar_lea.hbm %s1, %s226
          %s229 = sshll.u32 %s219, 4
          %s230 = int_to_ptr.vmem [resolvable:$true] %s229
          %232 = dma.hbm_to_vmem [thread:$0]  %s227, 128, %s230, %s216
        $region32: #{tpu_custom_call.1} parent=23 // pred_fallthru
          _
      $region24: #{tpu_custom_call.1} parent=5 // pred_fallthru
        _
      %p233 = scmp.le.s32.totalorder 1, %s20
      %p234 = scmp.lt.s32.totalorder %s20, 3
      %p235 = pnand %p233, %p234
      %p236 = pneg %p235
      // Predicated region
      $region33: #{tpu_custom_call.1} parent=5 // pred_check
        _
      $region34: #{tpu_custom_call.1} parent=5 // pred_check_branch
        %238 = sbr.rel (%p235) target = $region36
      $region35: #{tpu_custom_call.1} parent=5 // pred_region
        %s239 = ssub.s32 %s20, 1
        %s240 = sand.u32 %s47, 1
        %s241 = scalar_lea.sflag [#allocation4], %s240
        %s242 = sand.u32 %s47, 1
        %s243 = smul.addr %s242, 8
        %s244 = scalar_lea.vmem [#allocation3], %s243
        // Predicated region
        $region37: #{tpu_custom_call.1} parent=35 // pred_check
          %p245 = pneg %p60
        $region38: #{tpu_custom_call.1} parent=35 // pred_check_branch
          %247 = sbr.rel (%p245) target = $region40
        $region39: #{tpu_custom_call.1} parent=35 // pred_region
          %248 = dma.done %s241, 128
        $region40: #{tpu_custom_call.1} parent=35 // pred_fallthru
          _
        %s249 = sand.u32 %s25, 1
        %s250 = scalar_lea.sflag [#allocation7], %s249
        %s251 = sand.u32 %s75, 1
        %s252 = smul.addr %s251, 8
        %s253 = scalar_lea.vmem [#allocation6], %s252
        // Predicated region
        $region41: #{tpu_custom_call.1} parent=35 // pred_check
          %p254 = pneg %p88
        $region42: #{tpu_custom_call.1} parent=35 // pred_check_branch
          %256 = sbr.rel (%p254) target = $region44
        $region43: #{tpu_custom_call.1} parent=35 // pred_region
          %257 = dma.done %s250, 128
        $region44: #{tpu_custom_call.1} parent=35 // pred_fallthru
          _
        // Predicated region
        $region45: #{tpu_custom_call.1} parent=35 // pred_check
          %p258 = pneg %p109
        $region46: #{tpu_custom_call.1} parent=35 // pred_check_branch
          %260 = sbr.rel (%p258) target = $region48
        $region47: #{tpu_custom_call.1} parent=35 // pred_region
          %261 = dma.done [#allocation7], 128
        $region48: #{tpu_custom_call.1} parent=35 // pred_fallthru
          _
        %s262 = sand.u32 %s47, 1
        %s263 = scalar_lea.sflag [#allocation4], %s262
        %s264 = sand.u32 %s47, 1
        %s265 = smul.addr %s264, 8
        %s266 = scalar_lea.vmem [#allocation3], %s265
        %p267 = pneg %p60
        %p268 = pneg %p57
        %s269 = sand.u32 %s25, 1
        %s270 = scalar_lea.sflag [#allocation7], %s269
        %s271 = sand.u32 %s75, 1
        %s272 = smul.addr %s271, 8
        %s273 = scalar_lea.vmem [#allocation6], %s272
        %p274 = pneg %p88
        %p275 = pneg %p85
        %p276 = pneg %p109
        %p277 = pneg %p106
        %p278 = pneg %p130
        %p279 = pneg %p127
        %p280 = pneg %p158
        %p281 = pneg %p155
        %s282 = sand.u32 %s145, 1
        %s283 = scalar_lea.sflag [#allocation5], %s282
        %s284 = sand.u32 %s145, 1
        %s285 = smul.addr %s284, 8
        %s286 = scalar_lea.vmem [#allocation9], %s285
        %s287 = smul.u32 2, %s30
        %s288 = smul.u32 2, %s30
        %s289 = smul.u32 2, %s30
        %v290 = vld [vmem:[#allocation8] sm:$0xff]
        %s291 = sld [smem:[#allocation2]]
        %v292 = vld [vmem:[%s244] sm:$0xff]
        %v293 = vld [vmem:[%s253] sm:$0xff]
        %295 = vset.pattern.permute.xlu0 8
        %296 = vperm.xlu0 %295, %v290
        %v297 = vpop.permute.xlu0 %296
        %299 = vset.pattern.permute.xlu0 0
        %300 = vperm.xlu0 %299, %v290
        %v301 = vpop.permute.xlu0 %300
        %v304 = vlaneseq
        %v305 = vshrl.u32 %v304, 7
        %v306 = vsub.s32 0, %v305
        %v307 = vrot.slane %v292, %v306
        %v308 = vlaneseq
        %v309 = vshrl.u32 %v308, 7
        %v310 = vsub.s32 4, %v309
        %v311 = vrot.slane %v292, %v310
        %v314 = vlaneseq
        %v315 = vshrl.u32 %v314, 7
        %v316 = vsub.s32 0, %v315
        %v317 = vrot.slane %v307, %v316
        %v318 = vlaneseq
        %v319 = vshrl.u32 %v318, 7
        %v320 = vsub.s32 0, %v319
        %v321 = vrot.slane %v311, %v320
        %v322 = vmul.f32 %v301, %v317
        %v323 = vmul.f32 %v301, %v321
        %v324 = vadd.f32 %v297, %v322
        %v325 = vadd.f32 %v297, %v323
        %326 = vset.pattern.permute.xlu0 1
        %327 = vperm.xlu0 %326, %v290
        %v328 = vpop.permute.xlu0 %327
        %v330 = vlaneseq
        %v331 = vshrl.u32 %v330, 7
        %v332 = vsub.s32 1, %v331
        %v333 = vrot.slane %v292, %v332
        %v334 = vlaneseq
        %v335 = vshrl.u32 %v334, 7
        %v336 = vsub.s32 5, %v335
        %v337 = vrot.slane %v292, %v336
        %v340 = vlaneseq
        %v341 = vshrl.u32 %v340, 7
        %v342 = vsub.s32 1, %v341
        %v343 = vrot.slane %v333, %v342
        %v344 = vlaneseq
        %v345 = vshrl.u32 %v344, 7
        %v346 = vsub.s32 1, %v345
        %v347 = vrot.slane %v337, %v346
        %v348 = vmul.f32 %v328, %v343
        %v349 = vmul.f32 %v328, %v347
        %v350 = vadd.f32 %v324, %v348
        %v351 = vadd.f32 %v325, %v349
        %352 = vset.pattern.permute.xlu0 2
        %353 = vperm.xlu0 %352, %v290
        %v354 = vpop.permute.xlu0 %353
        %v356 = vlaneseq
        %v357 = vshrl.u32 %v356, 7
        %v358 = vsub.s32 2, %v357
        %v359 = vrot.slane %v292, %v358
        %v360 = vlaneseq
        %v361 = vshrl.u32 %v360, 7
        %v362 = vsub.s32 6, %v361
        %v363 = vrot.slane %v292, %v362
        %v366 = vlaneseq
        %v367 = vshrl.u32 %v366, 7
        %v368 = vsub.s32 2, %v367
        %v369 = vrot.slane %v359, %v368
        %v370 = vlaneseq
        %v371 = vshrl.u32 %v370, 7
        %v372 = vsub.s32 2, %v371
        %v373 = vrot.slane %v363, %v372
        %v374 = vmul.f32 %v354, %v369
        %v375 = vmul.f32 %v354, %v373
        %v376 = vadd.f32 %v350, %v374
        %v377 = vadd.f32 %v351, %v375
        %378 = vset.pattern.permute.xlu0 3
        %379 = vperm.xlu0 %378, %v290
        %v380 = vpop.permute.xlu0 %379
        %v382 = vlaneseq
        %v383 = vshrl.u32 %v382, 7
        %v384 = vsub.s32 3, %v383
        %v385 = vrot.slane %v292, %v384
        %v386 = vlaneseq
        %v387 = vshrl.u32 %v386, 7
        %v388 = vsub.s32 7, %v387
        %v389 = vrot.slane %v292, %v388
        %v392 = vlaneseq
        %v393 = vshrl.u32 %v392, 7
        %v394 = vsub.s32 3, %v393
        %v395 = vrot.slane %v385, %v394
        %v396 = vlaneseq
        %v397 = vshrl.u32 %v396, 7
        %v398 = vsub.s32 3, %v397
        %v399 = vrot.slane %v389, %v398
        %v400 = vmul.f32 %v380, %v395
        %v401 = vmul.f32 %v380, %v399
        %v402 = vadd.f32 %v376, %v400
        %v403 = vadd.f32 %v377, %v401
        %404 = vset.pattern.permute.xlu0 4
        %405 = vperm.xlu0 %404, %v290
        %v406 = vpop.permute.xlu0 %405
        %v409 = vlaneseq
        %v410 = vshrl.u32 %v409, 7
        %v411 = vsub.s32 0, %v410
        %v412 = vrot.slane %v293, %v411
        %v413 = vlaneseq
        %v414 = vshrl.u32 %v413, 7
        %v415 = vsub.s32 4, %v414
        %v416 = vrot.slane %v293, %v415
        %v419 = vlaneseq
        %v420 = vshrl.u32 %v419, 7
        %v421 = vsub.s32 0, %v420
        %v422 = vrot.slane %v412, %v421
        %v423 = vlaneseq
        %v424 = vshrl.u32 %v423, 7
        %v425 = vsub.s32 0, %v424
        %v426 = vrot.slane %v416, %v425
        %v427 = vmul.f32 %v406, %v422
        %v428 = vmul.f32 %v406, %v426
        %v429 = vadd.f32 %v402, %v427
        %v430 = vadd.f32 %v403, %v428
        %431 = vset.pattern.permute.xlu0 5
        %432 = vperm.xlu0 %431, %v290
        %v433 = vpop.permute.xlu0 %432
        %v435 = vlaneseq
        %v436 = vshrl.u32 %v435, 7
        %v437 = vsub.s32 1, %v436
        %v438 = vrot.slane %v293, %v437
        %v439 = vlaneseq
        %v440 = vshrl.u32 %v439, 7
        %v441 = vsub.s32 5, %v440
        %v442 = vrot.slane %v293, %v441
        %v445 = vlaneseq
        %v446 = vshrl.u32 %v445, 7
        %v447 = vsub.s32 1, %v446
        %v448 = vrot.slane %v438, %v447
        %v449 = vlaneseq
        %v450 = vshrl.u32 %v449, 7
        %v451 = vsub.s32 1, %v450
        %v452 = vrot.slane %v442, %v451
        %v453 = vmul.f32 %v433, %v448
        %v454 = vmul.f32 %v433, %v452
        %v455 = vadd.f32 %v429, %v453
        %v456 = vadd.f32 %v430, %v454
        %457 = vset.pattern.permute.xlu0 6
        %458 = vperm.xlu0 %457, %v290
        %v459 = vpop.permute.xlu0 %458
        %v461 = vlaneseq
        %v462 = vshrl.u32 %v461, 7
        %v463 = vsub.s32 2, %v462
        %v464 = vrot.slane %v293, %v463
        %v465 = vlaneseq
        %v466 = vshrl.u32 %v465, 7
        %v467 = vsub.s32 6, %v466
        %v468 = vrot.slane %v293, %v467
        %v471 = vlaneseq
        %v472 = vshrl.u32 %v471, 7
        %v473 = vsub.s32 2, %v472
        %v474 = vrot.slane %v464, %v473
        %v475 = vlaneseq
        %v476 = vshrl.u32 %v475, 7
        %v477 = vsub.s32 2, %v476
        %v478 = vrot.slane %v468, %v477
        %v479 = vmul.f32 %v459, %v474
        %v480 = vmul.f32 %v459, %v478
        %v481 = vadd.f32 %v455, %v479
        %v482 = vadd.f32 %v456, %v480
        %483 = vset.pattern.permute.xlu0 7
        %484 = vperm.xlu0 %483, %v290
        %v485 = vpop.permute.xlu0 %484
        %v487 = vlaneseq
        %v488 = vshrl.u32 %v487, 7
        %v489 = vsub.s32 3, %v488
        %v490 = vrot.slane %v293, %v489
        %v491 = vlaneseq
        %v492 = vshrl.u32 %v491, 7
        %v493 = vsub.s32 7, %v492
        %v494 = vrot.slane %v293, %v493
        %v497 = vlaneseq
        %v498 = vshrl.u32 %v497, 7
        %v499 = vsub.s32 3, %v498
        %v500 = vrot.slane %v490, %v499
        %v501 = vlaneseq
        %v502 = vshrl.u32 %v501, 7
        %v503 = vsub.s32 3, %v502
        %v504 = vrot.slane %v494, %v503
        %v505 = vmul.f32 %v485, %v500
        %v506 = vmul.f32 %v485, %v504
        %v507 = vadd.f32 %v481, %v505
        %v508 = vadd.f32 %v482, %v506
        %v509 = vmax.f32 %v507, 0.0
        %v510 = vmax.f32 %v508, 0.0
        %511 = vset.pattern.permute.xlu0 9
        %512 = vperm.xlu0 %511, %v290
        %v513 = vpop.permute.xlu0 %512
        %v515 = vmul.f32 %v513, %v509
        %v516 = vmul.f32 %v513, %v510
        %v517 = vrot.slane %v515, 4
        %v518 = vadd.f32 %v515, %v517
        %v519 = vrot.slane %v518, 2
        %v520 = vadd.f32 %v518, %v519
        %v521 = vrot.slane %v520, 1
        %v522 = vadd.f32 %v520, %v521
        %v523 = vrot.slane %v516, 4
        %v524 = vadd.f32 %v516, %v523
        %v525 = vrot.slane %v524, 2
        %v526 = vadd.f32 %v524, %v525
        %v527 = vrot.slane %v526, 1
        %v528 = vadd.f32 %v526, %v527
        %v529 = vstv %s291
        %v530 = vadd.f32 %v522, %v529
        %v531 = vadd.f32 %v528, %v529
        %v532 = vmul.f32 %v530, 0.5
        %v533 = vmul.f32 %v531, 0.5
        %v534 = vtanh.pop %v532
        %v535 = vtanh.pop %v533
        %v536 = vmul.f32 %v534, 0.5
        %v537 = vmul.f32 %v535, 0.5
        %v538 = vadd.f32 %v536, 0.5
        %v539 = vadd.f32 %v537, 0.5
        %v542 = vcombine.low %v538, %v539
        %v544 = vmul.f32 %v293, %v542
        %545 = vst [vmem:[%s286] sm:$0xff] %v544
        %s546 = sand.u32 %s145, 1
        %s547 = scalar_lea.sflag [#allocation5], %s546
        %s548 = sand.u32 %s145, 1
        %s549 = smul.addr %s548, 8
        %s550 = scalar_lea.vmem [#allocation9], %s549
        // Predicated region
        $region49: #{tpu_custom_call.1} parent=35 // pred_check
          %p551 = pneg %p155
        $region50: #{tpu_custom_call.1} parent=35 // pred_check_branch
          %553 = sbr.rel (%p551) target = $region52
        $region51: #{tpu_custom_call.1} parent=35 // pred_region
          %s554 = smul.u32 2, %s30
          %s556 = ssub.s32 128, 128
          %557 = vsyncadd %s547, %s556
          %s558 = smul.addr %s29, 2
          %s559 = sadd.s32 %s554, %s558
          %s560 = smul.addr %s559, 64
          %s561 = scalar_lea.hbm %s4, %s560
          %s563 = sshll.u32 %s550, 4
          %s564 = int_to_ptr.vmem [resolvable:$true] %s563
          %566 = dma.vmem_to_hbm [thread:$0]  %s564, 128, %s561, %s547
        $region52: #{tpu_custom_call.1} parent=35 // pred_fallthru
          _
      $region36: #{tpu_custom_call.1} parent=5 // pred_fallthru
        _
      %p567 = scmp.le.s32.totalorder 2, %s20
      // Predicated region
      $region53: #{tpu_custom_call.1} parent=5 // pred_check
        %p568 = pneg %p567
      $region54: #{tpu_custom_call.1} parent=5 // pred_check_branch
        %570 = sbr.rel (%p568) target = $region56
      $region55: #{tpu_custom_call.1} parent=5 // pred_region
        %s571 = ssub.s32 %s20, 2
        // Predicated region
        $region57: #{tpu_custom_call.1} parent=55 // pred_check
          %p572 = pneg %p161
        $region58: #{tpu_custom_call.1} parent=55 // pred_check_branch
          %574 = sbr.rel (%p572) target = $region60
        $region59: #{tpu_custom_call.1} parent=55 // pred_region
          %s575 = sand.u32 %s146, 1
          %s576 = scalar_lea.sflag [#allocation5], %s575
          %s577 = sand.u32 %s146, 1
          %s578 = smul.addr %s577, 8
          %s579 = scalar_lea.vmem [#allocation9], %s578
          %580 = dma.done %s576, 128
        $region60: #{tpu_custom_call.1} parent=55 // pred_fallthru
          _
      $region56: #{tpu_custom_call.1} parent=5 // pred_fallthru
        _
    $region6: #{tpu_custom_call.1} parent=1 // loop_footer
      %s24 = sadd.s32 1, %s20
    $region7: #{tpu_custom_call.1} parent=1 // loop_footer_branch
      %19 = sbr.rel target = $region3
    $region8: #{tpu_custom_call.1} parent=1 // loop_exit
      _
    %581 = vsyncpa [#allocation4], 1
    %s582 = scalar_lea.sflag [#allocation4], 1
    %583 = vsyncpa %s582, 1
    %584 = vsyncpa [#allocation7], 1
    %s585 = scalar_lea.sflag [#allocation7], 1
    %586 = vsyncpa %s585, 1
    %587 = vsyncpa [#allocation5], 1
    %s588 = scalar_lea.sflag [#allocation5], 1
    %589 = vsyncpa %s588, 1

</llo_original>
